<compile_context>
chip_gen: v5e
topology: v5e:2x2
jax: 0.10.0
libtpu: 0.0.40
codegen_flags: <defaults>
</compile_context>

<pallas_src>
import functools
import math

import jax
import jax.numpy as jnp
from jax.experimental import pallas as pl
from jax.experimental.pallas import tpu as pltpu


# ----------------------------- fused Pallas kernel ---------------------------
def _leaky(v, slope):
    return jnp.where(v >= 0.0, v, slope * v)


def _upsampling_block_kernel(*refs, depth, ksize, up_k, up_stride, neg_slope):
    """Whole UpsamplingBlock forward for the full batch, single invocation.

    refs (all whole arrays, VMEM resident):
      x_ref      (B, Cin, T)
      shift_ref  (B, Cs, Tu)      FiLM shift
      scale_ref  (B, Cs, Tu)      FiLM scale
      upw_ref    (Cin, up_k*Cin)  ConvTranspose1d weight, pre-flipped/packed
      upb_ref    (Cin, 1)
      depth x (pre_w (Cs, ksize*Cprev), pre_b (Cs, 1))
      depth x (post_w (Cx, ksize*Cs),  post_b (Cx, 1))
      o_ref      (B, Co, Tu)

    Internal activation layout is (C, B*T_cur): per-batch time segments are
    contiguous along the lane axis, so every conv layer is one lane-dense
    MXU matmul with bias + leaky-relu fused in the epilogue.
    """
    x_ref, shift_ref, scale_ref, upw_ref, upb_ref = refs[:5]
    conv_refs = refs[5:5 + 4 * depth]
    o_ref = refs[5 + 4 * depth]
    pre_refs = [(conv_refs[2 * i], conv_refs[2 * i + 1]) for i in range(depth)]
    post_refs = [(conv_refs[2 * depth + 2 * i], conv_refs[2 * depth + 2 * i + 1])
                 for i in range(depth)]

    B, _, T = x_ref.shape
    up_pad = (up_k - up_stride) // 2          # PyTorch ConvTranspose1d padding
    ext = up_k - 1 - up_pad                   # zero-pad of the dilated signal
    t_dil = (T - 1) * up_stride + 1 + 2 * ext
    t_up = t_dil - up_k + 1                   # == (T-1)*stride - 2*pad + up_k

    def im2col(h_pad_b, kk, t_out):
        # h_pad_b: (C, T_pad) one batch segment -> (kk*C, t_out); row = k*C + c
        return jnp.concatenate([h_pad_b[:, k:k + t_out] for k in range(kk)],
                               axis=0)

    # --- ConvTranspose1d(stride, pad) as: zero-dilate + pad via a 0/1
    #     selection matmul, then stride-1 valid conv with pre-flipped weights.
    rows = jax.lax.broadcasted_iota(jnp.int32, (T, t_dil), 0)
    cols_i = jax.lax.broadcasted_iota(jnp.int32, (T, t_dil), 1)
    dil_mat = jnp.where(cols_i == up_stride * rows + ext, 1.0, 0.0)  # (T, t_dil)

    up_cols = []
    for b in range(B):
        xd = jnp.dot(x_ref[b], dil_mat,
                     preferred_element_type=jnp.float32)             # (Cin, t_dil)
        up_cols.append(im2col(xd, up_k, t_up))
    cols = jnp.concatenate(up_cols, axis=1)                           # (up_k*Cin, B*t_up)
    h = jnp.dot(upw_ref[...], cols,
                preferred_element_type=jnp.float32) + upb_ref[...]
    h = _leaky(h, neg_slope)                                          # (Cin, B*t_up)

    def same_conv(h_cat, w_ref, b_ref):
        # stride-1 'same' conv on the (C, B*t_up) layout; per-batch zero pad.
        c = h_cat.shape[0]
        pad = (ksize - 1) // 2
        z = jnp.zeros((c, pad), jnp.float32)
        per_b = []
        for b in range(B):
            seg = h_cat[:, b * t_up:(b + 1) * t_up]
            hp = jnp.concatenate([z, seg, z], axis=1) if pad > 0 else seg
            per_b.append(im2col(hp, ksize, t_up))
        cc = jnp.concatenate(per_b, axis=1)                           # (ksize*C, B*t_up)
        out = jnp.dot(w_ref[...], cc,
                      preferred_element_type=jnp.float32) + b_ref[...]
        return _leaky(out, neg_slope)

    for w_ref, b_ref in pre_refs:
        h = same_conv(h, w_ref, b_ref)

    # FiLM modulation fused into the post-shortcut convs' input read.
    shift = jnp.concatenate([shift_ref[b] for b in range(B)], axis=1)  # (Cs, B*t_up)
    scale = jnp.concatenate([scale_ref[b] for b in range(B)], axis=1)
    for w_ref, b_ref in post_refs:
        h = same_conv(scale * h + shift, w_ref, b_ref)

    for b in range(B):
        o_ref[b] = h[:, b * t_up:(b + 1) * t_up].astype(o_ref.dtype)


# ----------------------------- parameters ------------------------------------
def init_upsampling_block_params(key, n_inputs, n_shortcut, n_outputs,
                                 kernel_size, depth, resample_kernel_size):
    """Raw parameters in PyTorch layouts (Conv1d: [Cout,Cin,K]; ConvT: [Cin,Cout,K])."""
    def conv_init(k, cout, cin, ksz):
        kw, kb = jax.random.split(k)
        s = 1.0 / math.sqrt(cin * ksz)
        return {"w": jax.random.uniform(kw, (cout, cin, ksz), jnp.float32, -s, s),
                "b": jax.random.uniform(kb, (cout,), jnp.float32, -s, s)}

    def conv_t_init(k, cin, cout, ksz):
        kw, kb = jax.random.split(k)
        s = 1.0 / math.sqrt(cout * ksz)
        return {"w": jax.random.uniform(kw, (cin, cout, ksz), jnp.float32, -s, s),
                "b": jax.random.uniform(kb, (cout,), jnp.float32, -s, s)}

    keys = iter(jax.random.split(key, 2 * depth + 2))
    params = {"up": conv_t_init(next(keys), n_inputs, n_inputs, resample_kernel_size)}
    pre = [conv_init(next(keys), n_shortcut, n_inputs, kernel_size)]
    pre += [conv_init(next(keys), n_shortcut, n_shortcut, kernel_size)
            for _ in range(depth - 1)]
    post = [conv_init(next(keys), n_shortcut, n_shortcut, kernel_size)
            for _ in range(depth - 1)]
    post.append(conv_init(next(keys), n_outputs, n_shortcut, kernel_size))
    params["pre"], params["post"] = pre, post
    return params


def _pack_conv(w, b):
    # (Cout, Cin, K) -> (Cout, K*Cin) so w2[o, k*Cin + c] = w[o, c, k]
    cout = w.shape[0]
    return (jnp.asarray(w).transpose(0, 2, 1).reshape(cout, -1).astype(jnp.float32),
            jnp.asarray(b).reshape(cout, 1).astype(jnp.float32))


def prepare_params(raw):
    """One-time weight preprocessing (hoisted out of the jitted forward)."""
    w_t = raw["up"]["w"]                                  # PyTorch [Cin, Cout, K]
    w_eff = jnp.flip(w_t, axis=2).transpose(1, 0, 2)      # -> correlation weights [Cout, Cin, K]
    return {"up": _pack_conv(w_eff, raw["up"]["b"]),
            "pre": [_pack_conv(p["w"], p["b"]) for p in raw["pre"]],
            "post": [_pack_conv(p["w"], p["b"]) for p in raw["post"]]}


# ----------------------------- forward wrapper --------------------------------
def upsampling_block_forward(prep, x, film_shift, film_scale, *,
                             kernel_size, depth, resample_kernel_size,
                             resample_stride, neg_slope=0.01):
    B, _, T = x.shape
    up_pad = (resample_kernel_size - resample_stride) // 2
    t_up = (T - 1) * resample_stride - 2 * up_pad + resample_kernel_size
    n_outputs = prep["post"][-1][0].shape[0]

    args = [x.astype(jnp.float32), film_shift.astype(jnp.float32),
            film_scale.astype(jnp.float32), prep["up"][0], prep["up"][1]]
    for w, b in prep["pre"]:
        args += [w, b]
    for w, b in prep["post"]:
        args += [w, b]

    kernel = functools.partial(_upsampling_block_kernel, depth=depth,
                               ksize=kernel_size, up_k=resample_kernel_size,
                               up_stride=resample_stride, neg_slope=neg_slope)
    vmem = pl.BlockSpec(memory_space=pltpu.MemorySpace.VMEM)
    return pl.pallas_call(
        kernel,
        out_shape=jax.ShapeDtypeStruct((B, n_outputs, t_up), jnp.float32),
        in_specs=[vmem] * len(args),
        out_specs=vmem,
    )(*args)


# ----------------------------- pure-JAX reference -----------------------------
def reference_forward(raw, x, film_shift, film_scale, *, kernel_size, depth,
                      resample_kernel_size, resample_stride, neg_slope=0.01):
    dn = ("NCH", "OIH", "NCH")

    def leaky(v):
        return jnp.where(v >= 0.0, v, neg_slope * v)

    up_pad = (resample_kernel_size - resample_stride) // 2
    ext = resample_kernel_size - 1 - up_pad
    w_eff = jnp.flip(raw["up"]["w"].transpose(1, 0, 2), axis=2)
    y = jax.lax.conv_general_dilated(
        x, w_eff, window_strides=(1,), padding=[(ext, ext)],
        lhs_dilation=(resample_stride,), rhs_dilation=(1,), dimension_numbers=dn)
    y = leaky(y + raw["up"]["b"][None, :, None])
    pad = (kernel_size - 1) // 2
    for p in raw["pre"]:
        y = leaky(jax.lax.conv_general_dilated(
            y, p["w"], window_strides=(1,), padding=[(pad, pad)],
            dimension_numbers=dn) + p["b"][None, :, None])
    for p in raw["post"]:
        y = film_scale * y + film_shift
        y = leaky(jax.lax.conv_general_dilated(
            y, p["w"], window_strides=(1,), padding=[(pad, pad)],
            dimension_numbers=dn) + p["b"][None, :, None])
    return y


# ----------------------------- main -------------------------------------------
if __name__ == "__main__":
    N_INPUTS, N_SHORTCUT, N_OUTPUTS = 16, 8, 8
    KERNEL_SIZE, DEPTH = 5, 1
    RESAMPLE_K, RESAMPLE_S = 4, 2
    B, T = 2, 16
    T_UP = (T - 1) * RESAMPLE_S - 2 * ((RESAMPLE_K - RESAMPLE_S) // 2) + RESAMPLE_K

    root = jax.random.PRNGKey(0)
    kp, kx, ksh, ksc = jax.random.split(root, 4)
    raw = init_upsampling_block_params(kp, N_INPUTS, N_SHORTCUT, N_OUTPUTS,
                                       KERNEL_SIZE, DEPTH, RESAMPLE_K)
    prep = prepare_params(raw)   # one-time flip/transpose/pack of all conv weights

    x = jax.random.normal(kx, (B, N_INPUTS, T), jnp.float32)
    film_shift = jax.random.normal(ksh, (B, N_SHORTCUT, T_UP), jnp.float32)
    film_scale = jax.random.normal(ksc, (B, N_SHORTCUT, T_UP), jnp.float32)

    fwd = jax.jit(functools.partial(upsampling_block_forward,
                                    kernel_size=KERNEL_SIZE, depth=DEPTH,
                                    resample_kernel_size=RESAMPLE_K,
                                    resample_stride=RESAMPLE_S))
    out = jax.block_until_ready(fwd(prep, x, film_shift, film_scale))
    assert out.shape == (B, N_OUTPUTS, T_UP), out.shape
    assert bool(jnp.all(jnp.isfinite(out)))

    ref = reference_forward(raw, x, film_shift, film_scale,
                            kernel_size=KERNEL_SIZE, depth=DEPTH,
                            resample_kernel_size=RESAMPLE_K,
                            resample_stride=RESAMPLE_S)
    assert jnp.allclose(out, ref, rtol=1e-4, atol=1e-4), \
        float(jnp.max(jnp.abs(out - ref)))
    print("KERNEL_OK")
</pallas_src>

<mosaic_0001>
module attributes {stable_mosaic.version = 11 : i64} {
  func.func @_upsampling_block_kernel(%arg0: memref<2x16x16xf32, #tpu.memory_space<vmem>>, %arg1: memref<2x8x32xf32, #tpu.memory_space<vmem>>, %arg2: memref<2x8x32xf32, #tpu.memory_space<vmem>>, %arg3: memref<16x64xf32, #tpu.memory_space<vmem>>, %arg4: memref<16x1xf32, #tpu.memory_space<vmem>>, %arg5: memref<8x80xf32, #tpu.memory_space<vmem>>, %arg6: memref<8x1xf32, #tpu.memory_space<vmem>>, %arg7: memref<8x40xf32, #tpu.memory_space<vmem>>, %arg8: memref<8x1xf32, #tpu.memory_space<vmem>>, %arg9: memref<2x8x32xf32, #tpu.memory_space<vmem>>) attributes {dimension_semantics = [], scalar_prefetch = 0 : i64, scratch_operands = 0 : i64, tpu.core_type = #tpu.core_type<tc>} {
    %0 = tpu.iota {dimensions = array<i32: 0>} : vector<16x35xi32>
    %1 = tpu.iota {dimensions = array<i32: 1>} : vector<16x35xi32>
    %c2_i32 = arith.constant 2 : i32
    %2 = vector.broadcast %c2_i32 : i32 to vector<16x35xi32>
    %3 = arith.muli %2, %0 : vector<16x35xi32>
    %c2_i32_0 = arith.constant 2 : i32
    %4 = vector.broadcast %c2_i32_0 : i32 to vector<16x35xi32>
    %5 = arith.addi %3, %4 : vector<16x35xi32>
    %6 = arith.cmpi eq, %1, %5 : vector<16x35xi32>
    %cst = arith.constant 1.000000e+00 : f32
    %cst_1 = arith.constant 0.000000e+00 : f32
    %7 = vector.broadcast %cst : f32 to vector<16x35xf32>
    %8 = vector.broadcast %cst_1 : f32 to vector<16x35xf32>
    %9 = arith.select %6, %7, %8 : vector<16x35xi1>, vector<16x35xf32>
    %c0 = arith.constant 0 : index
    %c0_2 = arith.constant 0 : index
    %c0_3 = arith.constant 0 : index
    %10 = vector.load %arg0[%c0, %c0_2, %c0_3] : memref<2x16x16xf32, #tpu.memory_space<vmem>>, vector<1x16x16xf32>
    %11 = vector.shape_cast %10 : vector<1x16x16xf32> to vector<16x16xf32>
    %cst_4 = arith.constant dense<0.000000e+00> : vector<16x35xf32>
    %12 = tpu.matmul %11, %9, %cst_4 {dimension_numbers = #tpu.dot_dimension_numbers<[1], [0], [0], [1], [0, 0, 1, 1], [], []>} : vector<16x16xf32>, vector<16x35xf32>, vector<16x35xf32> -> vector<16x35xf32>
    %13 = vector.extract_strided_slice %12 {offsets = [0, 0], sizes = [16, 32], strides = [1, 1]} : vector<16x35xf32> to vector<16x32xf32>
    %14 = vector.extract_strided_slice %12 {offsets = [0, 1], sizes = [16, 32], strides = [1, 1]} : vector<16x35xf32> to vector<16x32xf32>
    %15 = vector.extract_strided_slice %12 {offsets = [0, 2], sizes = [16, 32], strides = [1, 1]} : vector<16x35xf32> to vector<16x32xf32>
    %16 = vector.extract_strided_slice %12 {offsets = [0, 3], sizes = [16, 32], strides = [1, 1]} : vector<16x35xf32> to vector<16x32xf32>
    %17 = tpu.concatenate %13, %14, %15, %16 in 0 : vector<16x32xf32>, vector<16x32xf32>, vector<16x32xf32>, vector<16x32xf32> -> vector<64x32xf32>
    %c1 = arith.constant 1 : index
    %c0_5 = arith.constant 0 : index
    %c0_6 = arith.constant 0 : index
    %18 = vector.load %arg0[%c1, %c0_5, %c0_6] : memref<2x16x16xf32, #tpu.memory_space<vmem>>, vector<1x16x16xf32>
    %19 = vector.shape_cast %18 : vector<1x16x16xf32> to vector<16x16xf32>
    %cst_7 = arith.constant dense<0.000000e+00> : vector<16x35xf32>
    %20 = tpu.matmul %19, %9, %cst_7 {dimension_numbers = #tpu.dot_dimension_numbers<[1], [0], [0], [1], [0, 0, 1, 1], [], []>} : vector<16x16xf32>, vector<16x35xf32>, vector<16x35xf32> -> vector<16x35xf32>
    %21 = vector.extract_strided_slice %20 {offsets = [0, 0], sizes = [16, 32], strides = [1, 1]} : vector<16x35xf32> to vector<16x32xf32>
    %22 = vector.extract_strided_slice %20 {offsets = [0, 1], sizes = [16, 32], strides = [1, 1]} : vector<16x35xf32> to vector<16x32xf32>
    %23 = vector.extract_strided_slice %20 {offsets = [0, 2], sizes = [16, 32], strides = [1, 1]} : vector<16x35xf32> to vector<16x32xf32>
    %24 = vector.extract_strided_slice %20 {offsets = [0, 3], sizes = [16, 32], strides = [1, 1]} : vector<16x35xf32> to vector<16x32xf32>
    %25 = tpu.concatenate %21, %22, %23, %24 in 0 : vector<16x32xf32>, vector<16x32xf32>, vector<16x32xf32>, vector<16x32xf32> -> vector<64x32xf32>
    %26 = tpu.concatenate %17, %25 in 1 : vector<64x32xf32>, vector<64x32xf32> -> vector<64x64xf32>
    %c0_8 = arith.constant 0 : index
    %c0_9 = arith.constant 0 : index
    %27 = vector.load %arg3[%c0_8, %c0_9] : memref<16x64xf32, #tpu.memory_space<vmem>>, vector<16x64xf32>
    %cst_10 = arith.constant dense<0.000000e+00> : vector<16x64xf32>
    %28 = tpu.matmul %27, %26, %cst_10 {dimension_numbers = #tpu.dot_dimension_numbers<[1], [0], [0], [1], [0, 0, 1, 1], [], []>} : vector<16x64xf32>, vector<64x64xf32>, vector<16x64xf32> -> vector<16x64xf32>
    %c0_11 = arith.constant 0 : index
    %c0_12 = arith.constant 0 : index
    %29 = vector.load %arg4[%c0_11, %c0_12] : memref<16x1xf32, #tpu.memory_space<vmem>>, vector<16x1xf32>
    %30 = vector.broadcast %29 : vector<16x1xf32> to vector<16x64xf32>
    %31 = arith.addf %28, %30 : vector<16x64xf32>
    %cst_13 = arith.constant 0.000000e+00 : f32
    %32 = vector.broadcast %cst_13 : f32 to vector<16x64xf32>
    %33 = arith.cmpf oge, %31, %32 : vector<16x64xf32>
    %cst_14 = arith.constant 0.00999999977 : f32
    %34 = vector.broadcast %cst_14 : f32 to vector<16x64xf32>
    %35 = arith.mulf %34, %31 : vector<16x64xf32>
    %36 = arith.select %33, %31, %35 : vector<16x64xi1>, vector<16x64xf32>
    %cst_15 = arith.constant 0.000000e+00 : f32
    %37 = vector.broadcast %cst_15 : f32 to vector<16x2xf32>
    %38 = vector.extract_strided_slice %36 {offsets = [0, 0], sizes = [16, 32], strides = [1, 1]} : vector<16x64xf32> to vector<16x32xf32>
    %39 = tpu.concatenate %37, %38, %37 in 1 : vector<16x2xf32>, vector<16x32xf32>, vector<16x2xf32> -> vector<16x36xf32>
    %40 = vector.extract_strided_slice %39 {offsets = [0, 0], sizes = [16, 32], strides = [1, 1]} : vector<16x36xf32> to vector<16x32xf32>
    %41 = vector.extract_strided_slice %39 {offsets = [0, 1], sizes = [16, 32], strides = [1, 1]} : vector<16x36xf32> to vector<16x32xf32>
    %42 = vector.extract_strided_slice %39 {offsets = [0, 2], sizes = [16, 32], strides = [1, 1]} : vector<16x36xf32> to vector<16x32xf32>
    %43 = vector.extract_strided_slice %39 {offsets = [0, 3], sizes = [16, 32], strides = [1, 1]} : vector<16x36xf32> to vector<16x32xf32>
    %44 = vector.extract_strided_slice %39 {offsets = [0, 4], sizes = [16, 32], strides = [1, 1]} : vector<16x36xf32> to vector<16x32xf32>
    %45 = tpu.concatenate %40, %41, %42, %43, %44 in 0 : vector<16x32xf32>, vector<16x32xf32>, vector<16x32xf32>, vector<16x32xf32>, vector<16x32xf32> -> vector<80x32xf32>
    %46 = vector.extract_strided_slice %36 {offsets = [0, 32], sizes = [16, 32], strides = [1, 1]} : vector<16x64xf32> to vector<16x32xf32>
    %47 = tpu.concatenate %37, %46, %37 in 1 : vector<16x2xf32>, vector<16x32xf32>, vector<16x2xf32> -> vector<16x36xf32>
    %48 = vector.extract_strided_slice %47 {offsets = [0, 0], sizes = [16, 32], strides = [1, 1]} : vector<16x36xf32> to vector<16x32xf32>
    %49 = vector.extract_strided_slice %47 {offsets = [0, 1], sizes = [16, 32], strides = [1, 1]} : vector<16x36xf32> to vector<16x32xf32>
    %50 = vector.extract_strided_slice %47 {offsets = [0, 2], sizes = [16, 32], strides = [1, 1]} : vector<16x36xf32> to vector<16x32xf32>
    %51 = vector.extract_strided_slice %47 {offsets = [0, 3], sizes = [16, 32], strides = [1, 1]} : vector<16x36xf32> to vector<16x32xf32>
    %52 = vector.extract_strided_slice %47 {offsets = [0, 4], sizes = [16, 32], strides = [1, 1]} : vector<16x36xf32> to vector<16x32xf32>
    %53 = tpu.concatenate %48, %49, %50, %51, %52 in 0 : vector<16x32xf32>, vector<16x32xf32>, vector<16x32xf32>, vector<16x32xf32>, vector<16x32xf32> -> vector<80x32xf32>
    %54 = tpu.concatenate %45, %53 in 1 : vector<80x32xf32>, vector<80x32xf32> -> vector<80x64xf32>
    %c0_16 = arith.constant 0 : index
    %c0_17 = arith.constant 0 : index
    %55 = vector.load %arg5[%c0_16, %c0_17] : memref<8x80xf32, #tpu.memory_space<vmem>>, vector<8x80xf32>
    %cst_18 = arith.constant dense<0.000000e+00> : vector<8x64xf32>
    %56 = tpu.matmul %55, %54, %cst_18 {dimension_numbers = #tpu.dot_dimension_numbers<[1], [0], [0], [1], [0, 0, 1, 1], [], []>} : vector<8x80xf32>, vector<80x64xf32>, vector<8x64xf32> -> vector<8x64xf32>
    %c0_19 = arith.constant 0 : index
    %c0_20 = arith.constant 0 : index
    %57 = vector.load %arg6[%c0_19, %c0_20] : memref<8x1xf32, #tpu.memory_space<vmem>>, vector<8x1xf32>
    %58 = vector.broadcast %57 : vector<8x1xf32> to vector<8x64xf32>
    %59 = arith.addf %56, %58 : vector<8x64xf32>
    %cst_21 = arith.constant 0.000000e+00 : f32
    %60 = vector.broadcast %cst_21 : f32 to vector<8x64xf32>
    %61 = arith.cmpf oge, %59, %60 : vector<8x64xf32>
    %cst_22 = arith.constant 0.00999999977 : f32
    %62 = vector.broadcast %cst_22 : f32 to vector<8x64xf32>
    %63 = arith.mulf %62, %59 : vector<8x64xf32>
    %64 = arith.select %61, %59, %63 : vector<8x64xi1>, vector<8x64xf32>
    %c0_23 = arith.constant 0 : index
    %c0_24 = arith.constant 0 : index
    %c0_25 = arith.constant 0 : index
    %65 = vector.load %arg1[%c0_23, %c0_24, %c0_25] : memref<2x8x32xf32, #tpu.memory_space<vmem>>, vector<1x8x32xf32>
    %66 = vector.shape_cast %65 : vector<1x8x32xf32> to vector<8x32xf32>
    %c1_26 = arith.constant 1 : index
    %c0_27 = arith.constant 0 : index
    %c0_28 = arith.constant 0 : index
    %67 = vector.load %arg1[%c1_26, %c0_27, %c0_28] : memref<2x8x32xf32, #tpu.memory_space<vmem>>, vector<1x8x32xf32>
    %68 = vector.shape_cast %67 : vector<1x8x32xf32> to vector<8x32xf32>
    %69 = tpu.concatenate %66, %68 in 1 : vector<8x32xf32>, vector<8x32xf32> -> vector<8x64xf32>
    %c0_29 = arith.constant 0 : index
    %c0_30 = arith.constant 0 : index
    %c0_31 = arith.constant 0 : index
    %70 = vector.load %arg2[%c0_29, %c0_30, %c0_31] : memref<2x8x32xf32, #tpu.memory_space<vmem>>, vector<1x8x32xf32>
    %71 = vector.shape_cast %70 : vector<1x8x32xf32> to vector<8x32xf32>
    %c1_32 = arith.constant 1 : index
    %c0_33 = arith.constant 0 : index
    %c0_34 = arith.constant 0 : index
    %72 = vector.load %arg2[%c1_32, %c0_33, %c0_34] : memref<2x8x32xf32, #tpu.memory_space<vmem>>, vector<1x8x32xf32>
    %73 = vector.shape_cast %72 : vector<1x8x32xf32> to vector<8x32xf32>
    %74 = tpu.concatenate %71, %73 in 1 : vector<8x32xf32>, vector<8x32xf32> -> vector<8x64xf32>
    %75 = arith.mulf %74, %64 : vector<8x64xf32>
    %76 = arith.addf %75, %69 : vector<8x64xf32>
    %cst_35 = arith.constant 0.000000e+00 : f32
    %77 = vector.broadcast %cst_35 : f32 to vector<8x2xf32>
    %78 = vector.extract_strided_slice %76 {offsets = [0, 0], sizes = [8, 32], strides = [1, 1]} : vector<8x64xf32> to vector<8x32xf32>
    %79 = tpu.concatenate %77, %78, %77 in 1 : vector<8x2xf32>, vector<8x32xf32>, vector<8x2xf32> -> vector<8x36xf32>
    %80 = vector.extract_strided_slice %79 {offsets = [0, 0], sizes = [8, 32], strides = [1, 1]} : vector<8x36xf32> to vector<8x32xf32>
    %81 = vector.extract_strided_slice %79 {offsets = [0, 1], sizes = [8, 32], strides = [1, 1]} : vector<8x36xf32> to vector<8x32xf32>
    %82 = vector.extract_strided_slice %79 {offsets = [0, 2], sizes = [8, 32], strides = [1, 1]} : vector<8x36xf32> to vector<8x32xf32>
    %83 = vector.extract_strided_slice %79 {offsets = [0, 3], sizes = [8, 32], strides = [1, 1]} : vector<8x36xf32> to vector<8x32xf32>
    %84 = vector.extract_strided_slice %79 {offsets = [0, 4], sizes = [8, 32], strides = [1, 1]} : vector<8x36xf32> to vector<8x32xf32>
    %85 = tpu.concatenate %80, %81, %82, %83, %84 in 0 : vector<8x32xf32>, vector<8x32xf32>, vector<8x32xf32>, vector<8x32xf32>, vector<8x32xf32> -> vector<40x32xf32>
    %86 = vector.extract_strided_slice %76 {offsets = [0, 32], sizes = [8, 32], strides = [1, 1]} : vector<8x64xf32> to vector<8x32xf32>
    %87 = tpu.concatenate %77, %86, %77 in 1 : vector<8x2xf32>, vector<8x32xf32>, vector<8x2xf32> -> vector<8x36xf32>
    %88 = vector.extract_strided_slice %87 {offsets = [0, 0], sizes = [8, 32], strides = [1, 1]} : vector<8x36xf32> to vector<8x32xf32>
    %89 = vector.extract_strided_slice %87 {offsets = [0, 1], sizes = [8, 32], strides = [1, 1]} : vector<8x36xf32> to vector<8x32xf32>
    %90 = vector.extract_strided_slice %87 {offsets = [0, 2], sizes = [8, 32], strides = [1, 1]} : vector<8x36xf32> to vector<8x32xf32>
    %91 = vector.extract_strided_slice %87 {offsets = [0, 3], sizes = [8, 32], strides = [1, 1]} : vector<8x36xf32> to vector<8x32xf32>
    %92 = vector.extract_strided_slice %87 {offsets = [0, 4], sizes = [8, 32], strides = [1, 1]} : vector<8x36xf32> to vector<8x32xf32>
    %93 = tpu.concatenate %88, %89, %90, %91, %92 in 0 : vector<8x32xf32>, vector<8x32xf32>, vector<8x32xf32>, vector<8x32xf32>, vector<8x32xf32> -> vector<40x32xf32>
    %94 = tpu.concatenate %85, %93 in 1 : vector<40x32xf32>, vector<40x32xf32> -> vector<40x64xf32>
    %c0_36 = arith.constant 0 : index
    %c0_37 = arith.constant 0 : index
    %95 = vector.load %arg7[%c0_36, %c0_37] : memref<8x40xf32, #tpu.memory_space<vmem>>, vector<8x40xf32>
    %cst_38 = arith.constant dense<0.000000e+00> : vector<8x64xf32>
    %96 = tpu.matmul %95, %94, %cst_38 {dimension_numbers = #tpu.dot_dimension_numbers<[1], [0], [0], [1], [0, 0, 1, 1], [], []>} : vector<8x40xf32>, vector<40x64xf32>, vector<8x64xf32> -> vector<8x64xf32>
    %c0_39 = arith.constant 0 : index
    %c0_40 = arith.constant 0 : index
    %97 = vector.load %arg8[%c0_39, %c0_40] : memref<8x1xf32, #tpu.memory_space<vmem>>, vector<8x1xf32>
    %98 = vector.broadcast %97 : vector<8x1xf32> to vector<8x64xf32>
    %99 = arith.addf %96, %98 : vector<8x64xf32>
    %cst_41 = arith.constant 0.000000e+00 : f32
    %100 = vector.broadcast %cst_41 : f32 to vector<8x64xf32>
    %101 = arith.cmpf oge, %99, %100 : vector<8x64xf32>
    %cst_42 = arith.constant 0.00999999977 : f32
    %102 = vector.broadcast %cst_42 : f32 to vector<8x64xf32>
    %103 = arith.mulf %102, %99 : vector<8x64xf32>
    %104 = arith.select %101, %99, %103 : vector<8x64xi1>, vector<8x64xf32>
    %105 = vector.extract_strided_slice %104 {offsets = [0, 0], sizes = [8, 32], strides = [1, 1]} : vector<8x64xf32> to vector<8x32xf32>
    %c0_43 = arith.constant 0 : index
    %c0_44 = arith.constant 0 : index
    %c0_45 = arith.constant 0 : index
    %106 = vector.load %arg9[%c0_43, %c0_44, %c0_45] : memref<2x8x32xf32, #tpu.memory_space<vmem>>, vector<1x8x32xf32>
    %107 = vector.shape_cast %106 : vector<1x8x32xf32> to vector<8x32xf32>
    %108 = vector.shape_cast %105 : vector<8x32xf32> to vector<1x8x32xf32>
    tpu.vector_store %arg9[%c0_43, %c0_44, %c0_45], %108 {strides = array<i32>} : memref<2x8x32xf32, #tpu.memory_space<vmem>>, vector<1x8x32xf32>,
    %109 = vector.extract_strided_slice %104 {offsets = [0, 32], sizes = [8, 32], strides = [1, 1]} : vector<8x64xf32> to vector<8x32xf32>
    %c1_46 = arith.constant 1 : index
    %c0_47 = arith.constant 0 : index
    %c0_48 = arith.constant 0 : index
    %110 = vector.load %arg9[%c1_46, %c0_47, %c0_48] : memref<2x8x32xf32, #tpu.memory_space<vmem>>, vector<1x8x32xf32>
    %111 = vector.shape_cast %110 : vector<1x8x32xf32> to vector<8x32xf32>
    %112 = vector.shape_cast %109 : vector<8x32xf32> to vector<1x8x32xf32>
    tpu.vector_store %arg9[%c1_46, %c0_47, %c0_48], %112 {strides = array<i32>} : memref<2x8x32xf32, #tpu.memory_space<vmem>>, vector<1x8x32xf32>,
    return
  }
}

</mosaic_0001>

<llo_original>
// kernel: upsampling_block_forward.1
$region0: #{upsampling_block_forward.1}
  #allocation0 [shape = 'u32[]', space=smem, size = 0x4, offset = 0x4, fixed_abs, tag = 'smem constant byte address 0x4 - core index']
  #allocation1 [shape = 'u32[72,128]{1,0:T(1,128)}', space=vmem, size = 0x9000, scoped, tag = 'internal scratch']
  %s0 = inlined_call_operand.hbm [shape: f32[2,16,16], index: 0, kind: input, shape index: {}]
  %s1 = inlined_call_operand.vmem [shape: f32[2,8,32], index: 1, kind: input, shape index: {}]
  %s2 = inlined_call_operand.vmem [shape: f32[2,8,32], index: 2, kind: input, shape index: {}]
  %s3 = inlined_call_operand.hbm [shape: f32[16,64], index: 3, kind: input, shape index: {}]
  %s4 = inlined_call_operand.vmem [shape: f32[16,1], index: 4, kind: input, shape index: {}]
  %s5 = inlined_call_operand.hbm [shape: f32[8,80], index: 5, kind: input, shape index: {}]
  %s6 = inlined_call_operand.vmem [shape: f32[8,1], index: 6, kind: input, shape index: {}]
  %s7 = inlined_call_operand.hbm [shape: f32[8,40], index: 7, kind: input, shape index: {}]
  %s8 = inlined_call_operand.vmem [shape: f32[8,1], index: 8, kind: input, shape index: {}]
  %s9 = inlined_call_operand.hbm [shape: f32[2,8,32], index: 9, kind: output, shape index: {}]
  %s10 = sld [smem:[#allocation0]]
  $region62: #{upsampling_block_forward.1} parent=0
    _
  %s12 = ssub.s32 1, %s10
  %s13 = scalar_select 0, %s12, %s10
  $region1: #{upsampling_block_forward.1} parent=0
    #allocation2 [shape = 'u8[16384]{0}', space=vmem, size = 0x4000, scoped, tag = 'input window, operand 0, single buffered']
    #allocation3 [shape = 's32[1]{0}', space=sflag, size = 0x4, scoped, tag = 'scoped memory for upsampling_block_forward.1']
    #allocation4 [shape = 's32[1]{0}', space=sflag, size = 0x4, scoped, tag = 'scoped memory for upsampling_block_forward.1']
    #allocation5 [shape = 'u8[8192]{0}', space=vmem, size = 0x2000, scoped, tag = 'input window, operand 3, single buffered']
    #allocation6 [shape = 's32[1]{0}', space=sflag, size = 0x4, scoped, tag = 'scoped memory for upsampling_block_forward.1']
    #allocation7 [shape = 'u8[4096]{0}', space=vmem, size = 0x1000, scoped, tag = 'input window, operand 5, single buffered']
    #allocation8 [shape = 'u8[4096]{0}', space=vmem, size = 0x1000, scoped, tag = 'input window, operand 7, single buffered']
    #allocation9 [shape = 's32[1]{0}', space=sflag, size = 0x4, scoped, tag = 'scoped memory for upsampling_block_forward.1']
    #allocation10 [shape = 'u8[8192]{0}', space=vmem, size = 0x2000, scoped, tag = 'output window, operand 0, single buffered']
    %14 = vsyncpa [#allocation3], 0
    %15 = vsyncpa [#allocation6], 0
    %16 = vsyncpa [#allocation9], 0
    %17 = vsyncpa [#allocation4], 0
    // Predicated region
    $region2: #{upsampling_block_forward.1} parent=1 // pred_check
      _
    $region3: #{upsampling_block_forward.1} parent=1 // pred_check_branch
      %19 = sbr.rel (0) target = $region5
    $region4: #{upsampling_block_forward.1} parent=1 // pred_region
      %21 = vsyncadd [#allocation3], 0
      %s22 = sshll.u32 %s0, 4
      %s23 = int_to_ptr.hbm [resolvable:$true] %s22
      %s24 = sshll.u32 [#allocation2], 4
      %s25 = int_to_ptr.vmem [resolvable:$true] %s24
      %30 = dma.hbm_to_vmem [thread:$0]  %s23, 512, %s25, [#allocation3], 128, 128, 8
    $region5: #{upsampling_block_forward.1} parent=1 // pred_fallthru
      _
    // Predicated region
    $region6: #{upsampling_block_forward.1} parent=1 // pred_check
      _
    $region7: #{upsampling_block_forward.1} parent=1 // pred_check_branch
      %32 = sbr.rel (0) target = $region9
    $region8: #{upsampling_block_forward.1} parent=1 // pred_region
      _
    $region9: #{upsampling_block_forward.1} parent=1 // pred_fallthru
      _
    // Predicated region
    $region10: #{upsampling_block_forward.1} parent=1 // pred_check
      _
    $region11: #{upsampling_block_forward.1} parent=1 // pred_check_branch
      %34 = sbr.rel (0) target = $region13
    $region12: #{upsampling_block_forward.1} parent=1 // pred_region
      _
    $region13: #{upsampling_block_forward.1} parent=1 // pred_fallthru
      _
    // Predicated region
    $region14: #{upsampling_block_forward.1} parent=1 // pred_check
      _
    $region15: #{upsampling_block_forward.1} parent=1 // pred_check_branch
      %36 = sbr.rel (0) target = $region17
    $region16: #{upsampling_block_forward.1} parent=1 // pred_region
      %38 = vsyncadd [#allocation6], 0
      %s39 = sshll.u32 %s3, 4
      %s40 = int_to_ptr.hbm [resolvable:$true] %s39
      %s41 = sshll.u32 [#allocation5], 4
      %s42 = int_to_ptr.vmem [resolvable:$true] %s41
      %47 = dma.hbm_to_vmem [thread:$0]  %s40, 256, %s42, [#allocation6], 128, 128, 8
    $region17: #{upsampling_block_forward.1} parent=1 // pred_fallthru
      _
    // Predicated region
    $region18: #{upsampling_block_forward.1} parent=1 // pred_check
      _
    $region19: #{upsampling_block_forward.1} parent=1 // pred_check_branch
      %49 = sbr.rel (0) target = $region21
    $region20: #{upsampling_block_forward.1} parent=1 // pred_region
      _
    $region21: #{upsampling_block_forward.1} parent=1 // pred_fallthru
      _
    // Predicated region
    $region22: #{upsampling_block_forward.1} parent=1 // pred_check
      _
    $region23: #{upsampling_block_forward.1} parent=1 // pred_check_branch
      %51 = sbr.rel (0) target = $region25
    $region24: #{upsampling_block_forward.1} parent=1 // pred_region
      %53 = vsyncadd [#allocation6], 0
      %s55 = sshll.u32 %s5, 4
      %s56 = int_to_ptr.hbm [resolvable:$true] %s55
      %s57 = sshll.u32 [#allocation7], 4
      %s58 = int_to_ptr.vmem [resolvable:$true] %s57
      %60 = dma.hbm_to_vmem [thread:$0]  %s56, 128, %s58, [#allocation6]
    $region25: #{upsampling_block_forward.1} parent=1 // pred_fallthru
      _
    // Predicated region
    $region26: #{upsampling_block_forward.1} parent=1 // pred_check
      _
    $region27: #{upsampling_block_forward.1} parent=1 // pred_check_branch
      %62 = sbr.rel (0) target = $region29
    $region28: #{upsampling_block_forward.1} parent=1 // pred_region
      _
    $region29: #{upsampling_block_forward.1} parent=1 // pred_fallthru
      _
    // Predicated region
    $region30: #{upsampling_block_forward.1} parent=1 // pred_check
      _
    $region31: #{upsampling_block_forward.1} parent=1 // pred_check_branch
      %64 = sbr.rel (0) target = $region33
    $region32: #{upsampling_block_forward.1} parent=1 // pred_region
      %66 = vsyncadd [#allocation9], 0
      %s68 = sshll.u32 %s7, 4
      %s69 = int_to_ptr.hbm [resolvable:$true] %s68
      %s70 = sshll.u32 [#allocation8], 4
      %s71 = int_to_ptr.vmem [resolvable:$true] %s70
      %73 = dma.hbm_to_vmem [thread:$0]  %s69, 128, %s71, [#allocation9]
    $region33: #{upsampling_block_forward.1} parent=1 // pred_fallthru
      _
    // Predicated region
    $region34: #{upsampling_block_forward.1} parent=1 // pred_check
      _
    $region35: #{upsampling_block_forward.1} parent=1 // pred_check_branch
      %75 = sbr.rel (0) target = $region37
    $region36: #{upsampling_block_forward.1} parent=1 // pred_region
      _
    $region37: #{upsampling_block_forward.1} parent=1 // pred_fallthru
      _
    // Predicated region
    $region38: #{upsampling_block_forward.1} parent=1 // pred_check
      _
    $region39: #{upsampling_block_forward.1} parent=1 // pred_check_branch
      %77 = sbr.rel (0) target = $region41
    $region40: #{upsampling_block_forward.1} parent=1 // pred_region
      %79 = dma.done [#allocation3], 512
    $region41: #{upsampling_block_forward.1} parent=1 // pred_fallthru
      _
    // Predicated region
    $region42: #{upsampling_block_forward.1} parent=1 // pred_check
      _
    $region43: #{upsampling_block_forward.1} parent=1 // pred_check_branch
      %81 = sbr.rel (0) target = $region45
    $region44: #{upsampling_block_forward.1} parent=1 // pred_region
      %83 = dma.done [#allocation6], 256
    $region45: #{upsampling_block_forward.1} parent=1 // pred_fallthru
      _
    // Predicated region
    $region46: #{upsampling_block_forward.1} parent=1 // pred_check
      _
    $region47: #{upsampling_block_forward.1} parent=1 // pred_check_branch
      %85 = sbr.rel (0) target = $region49
    $region48: #{upsampling_block_forward.1} parent=1 // pred_region
      %87 = dma.done [#allocation6], 128
    $region49: #{upsampling_block_forward.1} parent=1 // pred_fallthru
      _
    // Predicated region
    $region50: #{upsampling_block_forward.1} parent=1 // pred_check
      _
    $region51: #{upsampling_block_forward.1} parent=1 // pred_check_branch
      %89 = sbr.rel (0) target = $region53
    $region52: #{upsampling_block_forward.1} parent=1 // pred_region
      %91 = dma.done [#allocation9], 128
    $region53: #{upsampling_block_forward.1} parent=1 // pred_fallthru
      _
    %v92 = vlaneseq
    %v93 = vshrl.u32 %v92, 7
    %v94 = vadd.s32 %v93, 8
    %v95 = vlaneseq
    %v96 = vand.u32 %v95, 127
    %v97 = vmul.u32 %v93, 2
    %v98 = vmul.u32 %v94, 2
    %v99 = vadd.s32 %v97, 2
    %v100 = vadd.s32 %v98, 2
    %vm101 = vcmp.eq.s32.totalorder %v96, %v99
    %vm102 = vcmp.eq.s32.totalorder %v96, %v100
    %v103 = vsel %vm101, 1.0, 0.0
    %v104 = vsel %vm102, 1.0, 0.0
    %v105 = vld [vmem:[#allocation2] sm:$0xff]
    %v106 = vld [vmem:[#allocation2 + $0x8] sm:$0xff]
    %vm107 = vcmask 130048
    %v109 = vsel %vm107, %v105, 0
    %v112 = vsel %vm107, %v106, 0
    %114 = vmatpush.msra.mxu0 0.0
    %115 = vmatpush.msra.mxu0 0.0
    %116 = vmatpush.msra.mxu0 0.0
    %117 = vmatpush.msra.mxu0 0.0
    %118 = vmatpush.msra.mxu0 0.0
    %119 = vmatpush.msra.mxu0 0.0
    %120 = vmatpush.msra.mxu0 0.0
    %121 = vmatpush.msra.mxu0 0.0
    %122 = vmatpush.msra.mxu0 0.0
    %123 = vmatpush.msra.mxu0 0.0
    %124 = vmatpush.msra.mxu0 0.0
    %125 = vmatpush.msra.mxu0 0.0
    %126 = vmatpush.msra.mxu0 0.0
    %127 = vmatpush.msra.mxu0 0.0
    %128 = vmatpush.msra.mxu0 %v104
    %129 = vmatpush.msra.mxu0 %v103
    %130 = vmatmul.f32.gmra.mxu0 %v109
    %v131 = vpop.f32.mrf.mxu0
    %v132 = vadd.f32 0.0, %v131
    %133 = vmatmul.f32.gmra.mxu0 %v112
    %v134 = vpop.f32.mrf.mxu0
    %v135 = vadd.f32 0.0, %v134
    %136 = vdwg.mxu0
    %139 = vrot.lane.b32.xlu0 %v132, 127
    %v140 = vpop.permute.xlu0 %139
    %141 = vrot.lane.b32.xlu0 %v135, 127
    %v142 = vpop.permute.xlu0 %141
    %145 = vrot.lane.b32.xlu0 %v132, 126
    %v146 = vpop.permute.xlu0 %145
    %147 = vrot.lane.b32.xlu0 %v135, 126
    %v148 = vpop.permute.xlu0 %147
    %151 = vrot.lane.b32.xlu0 %v132, 125
    %v152 = vpop.permute.xlu0 %151
    %153 = vrot.lane.b32.xlu0 %v135, 125
    %v154 = vpop.permute.xlu0 %153
    %s157 = scalar_lea.vmem [#allocation2], 16
    %v158 = vld [vmem:[%s157] sm:$0xff]
    %v159 = vld [vmem:[%s157 + $0x8] sm:$0xff]
    %v161 = vsel %vm107, %v158, 0
    %v164 = vsel %vm107, %v159, 0
    %166 = vmatpush.msra.mxu0 0.0
    %167 = vmatpush.msra.mxu0 0.0
    %168 = vmatpush.msra.mxu0 0.0
    %169 = vmatpush.msra.mxu0 0.0
    %170 = vmatpush.msra.mxu0 0.0
    %171 = vmatpush.msra.mxu0 0.0
    %172 = vmatpush.msra.mxu0 0.0
    %173 = vmatpush.msra.mxu0 0.0
    %174 = vmatpush.msra.mxu0 0.0
    %175 = vmatpush.msra.mxu0 0.0
    %176 = vmatpush.msra.mxu0 0.0
    %177 = vmatpush.msra.mxu0 0.0
    %178 = vmatpush.msra.mxu0 0.0
    %179 = vmatpush.msra.mxu0 0.0
    %180 = vmatpush.msra.mxu0 %v104
    %181 = vmatpush.msra.mxu0 %v103
    %182 = vmatmul.f32.gmra.mxu0 %v161
    %v183 = vpop.f32.mrf.mxu0
    %v184 = vadd.f32 0.0, %v183
    %185 = vmatmul.f32.gmra.mxu0 %v164
    %v186 = vpop.f32.mrf.mxu0
    %v187 = vadd.f32 0.0, %v186
    %188 = vdwg.mxu0
    %191 = vrot.lane.b32.xlu0 %v184, 127
    %v192 = vpop.permute.xlu0 %191
    %193 = vrot.lane.b32.xlu0 %v187, 127
    %v194 = vpop.permute.xlu0 %193
    %195 = vrot.lane.b32.xlu0 %v184, 126
    %v196 = vpop.permute.xlu0 %195
    %197 = vrot.lane.b32.xlu0 %v187, 126
    %v198 = vpop.permute.xlu0 %197
    %199 = vrot.lane.b32.xlu0 %v184, 125
    %v200 = vpop.permute.xlu0 %199
    %201 = vrot.lane.b32.xlu0 %v187, 125
    %v202 = vpop.permute.xlu0 %201
    %203 = vrot.lane.b32.xlu0 %v184, 32
    %v204 = vpop.permute.xlu0 %203
    %205 = vrot.lane.b32.xlu0 %v187, 32
    %v206 = vpop.permute.xlu0 %205
    %207 = vrot.lane.b32.xlu0 %v192, 32
    %v208 = vpop.permute.xlu0 %207
    %209 = vrot.lane.b32.xlu0 %v194, 32
    %v210 = vpop.permute.xlu0 %209
    %211 = vrot.lane.b32.xlu0 %v196, 32
    %v212 = vpop.permute.xlu0 %211
    %213 = vrot.lane.b32.xlu0 %v198, 32
    %v214 = vpop.permute.xlu0 %213
    %215 = vrot.lane.b32.xlu0 %v200, 32
    %v216 = vpop.permute.xlu0 %215
    %217 = vrot.lane.b32.xlu0 %v202, 32
    %v218 = vpop.permute.xlu0 %217
    %vm227 = vcmask 261120
    %v228 = vsel %vm227, %v132, %v204
    %v229 = vsel %vm227, %v135, %v206
    %v230 = vsel %vm227, %v140, %v208
    %v231 = vsel %vm227, %v142, %v210
    %v232 = vsel %vm227, %v146, %v212
    %v233 = vsel %vm227, %v148, %v214
    %v234 = vsel %vm227, %v152, %v216
    %v235 = vsel %vm227, %v154, %v218
    %v236 = vld [vmem:[#allocation5] sm:$0xff]
    %v237 = vld [vmem:[#allocation5 + $0x8] sm:$0xff]
    %v238 = vld [vmem:[%s4] sm:$0xff]
    %v239 = vld [vmem:[%s4 + $0x8] sm:$0xff]
    %241 = vset.pattern.permute.xlu0 0
    %242 = vperm.xlu0 %241, %v238
    %v243 = vpop.permute.xlu0 %242
    %246 = vset.pattern.permute.xlu0 0
    %247 = vperm.xlu0 %246, %v239
    %v248 = vpop.permute.xlu0 %247
    %vm250 = vcmask 523264
    %v252 = vsel %vm250, %v236, 0
    %v255 = vsel %vm250, %v237, 0
    %257 = vmatpush.msra.mxu0 0.0
    %258 = vmatpush.msra.mxu0 0.0
    %259 = vmatpush.msra.mxu0 0.0
    %260 = vmatpush.msra.mxu0 0.0
    %261 = vmatpush.msra.mxu0 0.0
    %262 = vmatpush.msra.mxu0 0.0
    %263 = vmatpush.msra.mxu0 0.0
    %264 = vmatpush.msra.mxu0 0.0
    %265 = vmatpush.msra.mxu0 %v235
    %266 = vmatpush.msra.mxu0 %v234
    %267 = vmatpush.msra.mxu0 %v233
    %268 = vmatpush.msra.mxu0 %v232
    %269 = vmatpush.msra.mxu0 %v231
    %270 = vmatpush.msra.mxu0 %v230
    %271 = vmatpush.msra.mxu0 %v229
    %272 = vmatpush.msra.mxu0 %v228
    %273 = vmatmul.f32.gmra.mxu0 %v252
    %v274 = vpop.f32.mrf.mxu0
    %v275 = vadd.f32 %v243, %v274
    %276 = vmatmul.f32.gmra.mxu0 %v255
    %v277 = vpop.f32.mrf.mxu0
    %v278 = vadd.f32 %v248, %v277
    %279 = vdwg.mxu0
    %vm280 = vcmp.ge.f32.partialorder %v275, 0.0
    %vm281 = vcmp.ge.f32.partialorder %v278, 0.0
    %v282 = vmul.f32 %v275, 0.01
    %v283 = vmul.f32 %v278, 0.01
    %v284 = vsel %vm280, %v275, %v282
    %v285 = vsel %vm281, %v278, %v283
    %288 = vrot.lane.b32.xlu0 %v284, 2
    %v289 = vpop.permute.xlu0 %288
    %290 = vrot.lane.b32.xlu0 %v285, 2
    %v291 = vpop.permute.xlu0 %290
    %vm294 = vcmask 15360
    %v295 = vsel %vm294, 0.0, %v289
    %v296 = vsel %vm294, 0.0, %v291
    %vm297 = vcmask 277504
    %v298 = vsel %vm297, %v295, 0.0
    %v299 = vsel %vm297, %v296, 0.0
    %302 = vrot.lane.b32.xlu0 %v298, 127
    %v303 = vpop.permute.xlu0 %302
    %304 = vrot.lane.b32.xlu0 %v299, 127
    %v305 = vpop.permute.xlu0 %304
    %308 = vrot.lane.b32.xlu0 %v298, 126
    %v309 = vpop.permute.xlu0 %308
    %310 = vrot.lane.b32.xlu0 %v299, 126
    %v311 = vpop.permute.xlu0 %310
    %314 = vrot.lane.b32.xlu0 %v298, 125
    %v315 = vpop.permute.xlu0 %314
    %316 = vrot.lane.b32.xlu0 %v299, 125
    %v317 = vpop.permute.xlu0 %316
    %320 = vrot.lane.b32.xlu0 %v298, 124
    %v321 = vpop.permute.xlu0 %320
    %322 = vrot.lane.b32.xlu0 %v299, 124
    %v323 = vpop.permute.xlu0 %322
    %326 = vrot.lane.b32.xlu0 %v284, 98
    %v327 = vpop.permute.xlu0 %326
    %328 = vrot.lane.b32.xlu0 %v285, 98
    %v329 = vpop.permute.xlu0 %328
    %v332 = vsel %vm294, 0.0, %v327
    %v333 = vsel %vm294, 0.0, %v329
    %v334 = vsel %vm297, %v332, 0.0
    %v335 = vsel %vm297, %v333, 0.0
    %338 = vrot.lane.b32.xlu0 %v334, 127
    %v339 = vpop.permute.xlu0 %338
    %340 = vrot.lane.b32.xlu0 %v335, 127
    %v341 = vpop.permute.xlu0 %340
    %342 = vrot.lane.b32.xlu0 %v334, 126
    %v343 = vpop.permute.xlu0 %342
    %344 = vrot.lane.b32.xlu0 %v335, 126
    %v345 = vpop.permute.xlu0 %344
    %346 = vrot.lane.b32.xlu0 %v334, 125
    %v347 = vpop.permute.xlu0 %346
    %348 = vrot.lane.b32.xlu0 %v335, 125
    %v349 = vpop.permute.xlu0 %348
    %350 = vrot.lane.b32.xlu0 %v334, 124
    %v351 = vpop.permute.xlu0 %350
    %352 = vrot.lane.b32.xlu0 %v335, 124
    %v353 = vpop.permute.xlu0 %352
    %354 = vrot.lane.b32.xlu0 %v334, 32
    %v355 = vpop.permute.xlu0 %354
    %356 = vrot.lane.b32.xlu0 %v335, 32
    %v357 = vpop.permute.xlu0 %356
    %358 = vrot.lane.b32.xlu0 %v339, 32
    %v359 = vpop.permute.xlu0 %358
    %360 = vrot.lane.b32.xlu0 %v341, 32
    %v361 = vpop.permute.xlu0 %360
    %362 = vrot.lane.b32.xlu0 %v343, 32
    %v363 = vpop.permute.xlu0 %362
    %364 = vrot.lane.b32.xlu0 %v345, 32
    %v365 = vpop.permute.xlu0 %364
    %366 = vrot.lane.b32.xlu0 %v347, 32
    %v367 = vpop.permute.xlu0 %366
    %368 = vrot.lane.b32.xlu0 %v349, 32
    %v369 = vpop.permute.xlu0 %368
    %370 = vrot.lane.b32.xlu0 %v351, 32
    %v371 = vpop.permute.xlu0 %370
    %372 = vrot.lane.b32.xlu0 %v353, 32
    %v373 = vpop.permute.xlu0 %372
    %v384 = vsel %vm227, %v298, %v355
    %v385 = vsel %vm227, %v299, %v357
    %v386 = vsel %vm227, %v303, %v359
    %v387 = vsel %vm227, %v305, %v361
    %v388 = vsel %vm227, %v309, %v363
    %v389 = vsel %vm227, %v311, %v365
    %v390 = vsel %vm227, %v315, %v367
    %v391 = vsel %vm227, %v317, %v369
    %v392 = vsel %vm227, %v321, %v371
    %v393 = vsel %vm227, %v323, %v373
    %v394 = vld [vmem:[#allocation7] sm:$0xff]
    %v395 = vld [vmem:[%s6] sm:$0xff]
    %397 = vset.pattern.permute.xlu0 0
    %398 = vperm.xlu0 %397, %v395
    %v399 = vpop.permute.xlu0 %398
    %vm401 = vcmask 654336
    %v403 = vsel %vm401, %v394, 0
    %405 = vmatpush.msra.mxu0 0.0
    %406 = vmatpush.msra.mxu0 0.0
    %407 = vmatpush.msra.mxu0 0.0
    %408 = vmatpush.msra.mxu0 0.0
    %409 = vmatpush.msra.mxu0 0.0
    %410 = vmatpush.msra.mxu0 0.0
    %411 = vmatpush.msra.mxu0 %v393
    %412 = vmatpush.msra.mxu0 %v392
    %413 = vmatpush.msra.mxu0 %v391
    %414 = vmatpush.msra.mxu0 %v390
    %415 = vmatpush.msra.mxu0 %v389
    %416 = vmatpush.msra.mxu0 %v388
    %417 = vmatpush.msra.mxu0 %v387
    %418 = vmatpush.msra.mxu0 %v386
    %419 = vmatpush.msra.mxu0 %v385
    %420 = vmatpush.msra.mxu0 %v384
    %421 = vmatmul.f32.gmra.mxu0 %v403
    %v422 = vpop.f32.mrf.mxu0
    %v423 = vadd.f32 %v399, %v422
    %424 = vdwg.mxu0
    %vm425 = vcmp.ge.f32.partialorder %v423, 0.0
    %v426 = vmul.f32 %v423, 0.01
    %v427 = vsel %vm425, %v423, %v426
    %v428 = vld [vmem:[%s1] sm:$0xff]
    %s429 = scalar_lea.vmem %s1, 8
    %v430 = vld [vmem:[%s429] sm:$0xff]
    %432 = vrot.lane.b32.xlu0 %v430, 32
    %v433 = vpop.permute.xlu0 %432
    %v435 = vsel %vm227, %v428, %v433
    %v436 = vld [vmem:[%s2] sm:$0xff]
    %s437 = scalar_lea.vmem %s2, 8
    %v438 = vld [vmem:[%s437] sm:$0xff]
    %440 = vrot.lane.b32.xlu0 %v438, 32
    %v441 = vpop.permute.xlu0 %440
    %v443 = vsel %vm227, %v436, %v441
    %v444 = vmul.f32 %v443, %v427
    %v445 = vadd.f32 %v444, %v435
    %447 = vrot.lane.b32.xlu0 %v445, 2
    %v448 = vpop.permute.xlu0 %447
    %v450 = vsel %vm294, 0.0, %v448
    %v451 = vsel %vm297, %v450, 0.0
    %453 = vrot.lane.b32.xlu0 %v451, 127
    %v454 = vpop.permute.xlu0 %453
    %456 = vrot.lane.b32.xlu0 %v451, 126
    %v457 = vpop.permute.xlu0 %456
    %459 = vrot.lane.b32.xlu0 %v451, 125
    %v460 = vpop.permute.xlu0 %459
    %462 = vrot.lane.b32.xlu0 %v451, 124
    %v463 = vpop.permute.xlu0 %462
    %465 = vrot.lane.b32.xlu0 %v445, 98
    %v466 = vpop.permute.xlu0 %465
    %v468 = vsel %vm294, 0.0, %v466
    %v469 = vsel %vm297, %v468, 0.0
    %471 = vrot.lane.b32.xlu0 %v469, 127
    %v472 = vpop.permute.xlu0 %471
    %473 = vrot.lane.b32.xlu0 %v469, 126
    %v474 = vpop.permute.xlu0 %473
    %475 = vrot.lane.b32.xlu0 %v469, 125
    %v476 = vpop.permute.xlu0 %475
    %477 = vrot.lane.b32.xlu0 %v469, 124
    %v478 = vpop.permute.xlu0 %477
    %479 = vrot.lane.b32.xlu0 %v469, 32
    %v480 = vpop.permute.xlu0 %479
    %481 = vrot.lane.b32.xlu0 %v472, 32
    %v482 = vpop.permute.xlu0 %481
    %483 = vrot.lane.b32.xlu0 %v474, 32
    %v484 = vpop.permute.xlu0 %483
    %485 = vrot.lane.b32.xlu0 %v476, 32
    %v486 = vpop.permute.xlu0 %485
    %487 = vrot.lane.b32.xlu0 %v478, 32
    %v488 = vpop.permute.xlu0 %487
    %v494 = vsel %vm227, %v451, %v480
    %v495 = vsel %vm227, %v454, %v482
    %v496 = vsel %vm227, %v457, %v484
    %v497 = vsel %vm227, %v460, %v486
    %v498 = vsel %vm227, %v463, %v488
    %v499 = vld [vmem:[#allocation8] sm:$0xff]
    %v500 = vld [vmem:[%s8] sm:$0xff]
    %502 = vset.pattern.permute.xlu0 0
    %503 = vperm.xlu0 %502, %v500
    %v504 = vpop.permute.xlu0 %503
    %vm506 = vcmask 326656
    %v508 = vsel %vm506, %v499, 0
    %510 = vmatpush.msra.mxu0 0.0
    %511 = vmatpush.msra.mxu0 0.0
    %512 = vmatpush.msra.mxu0 0.0
    %513 = vmatpush.msra.mxu0 0.0
    %514 = vmatpush.msra.mxu0 0.0
    %515 = vmatpush.msra.mxu0 0.0
    %516 = vmatpush.msra.mxu0 0.0
    %517 = vmatpush.msra.mxu0 0.0
    %518 = vmatpush.msra.mxu0 0.0
    %519 = vmatpush.msra.mxu0 0.0
    %520 = vmatpush.msra.mxu0 0.0
    %521 = vmatpush.msra.mxu0 %v498
    %522 = vmatpush.msra.mxu0 %v497
    %523 = vmatpush.msra.mxu0 %v496
    %524 = vmatpush.msra.mxu0 %v495
    %525 = vmatpush.msra.mxu0 %v494
    %526 = vmatmul.f32.gmra.mxu0 %v508
    %v527 = vpop.f32.mrf.mxu0
    %v528 = vadd.f32 %v504, %v527
    %529 = vdwg.mxu0
    %vm530 = vcmp.ge.f32.partialorder %v528, 0.0
    %v531 = vmul.f32 %v528, 0.01
    %v532 = vsel %vm530, %v528, %v531
    %533 = vst.msk [vmem:[#allocation10] sm:$0xff] %vm227, %v532
    %535 = vrot.lane.b32.xlu0 %v532, 96
    %v536 = vpop.permute.xlu0 %535
    %s538 = scalar_lea.vmem [#allocation10], 8
    %539 = vst.msk [vmem:[%s538] sm:$0xff] %vm227, %v536
    // Predicated region
    $region54: #{upsampling_block_forward.1} parent=1 // pred_check
      _
    $region55: #{upsampling_block_forward.1} parent=1 // pred_check_branch
      %541 = sbr.rel (0) target = $region57
    $region56: #{upsampling_block_forward.1} parent=1 // pred_region
      %543 = vsyncadd [#allocation4], 0
      %s544 = sshll.u32 [#allocation10], 4
      %s545 = int_to_ptr.vmem [resolvable:$true] %s544
      %s546 = sshll.u32 %s9, 4
      %s547 = int_to_ptr.hbm [resolvable:$true] %s546
      %552 = dma.vmem_to_hbm [thread:$0]  %s545, 256, %s547, [#allocation4], 128, 128, 8
    $region57: #{upsampling_block_forward.1} parent=1 // pred_fallthru
      _
    // Predicated region
    $region58: #{upsampling_block_forward.1} parent=1 // pred_check
      _
    $region59: #{upsampling_block_forward.1} parent=1 // pred_check_branch
      %554 = sbr.rel (0) target = $region61
    $region60: #{upsampling_block_forward.1} parent=1 // pred_region
      %556 = dma.done [#allocation4], 256
    $region61: #{upsampling_block_forward.1} parent=1 // pred_fallthru
      _
    %557 = vsyncpa [#allocation3], 1
    %558 = vsyncpa [#allocation6], 1
    %559 = vsyncpa [#allocation9], 1
    %560 = vsyncpa [#allocation4], 1

</llo_original>
